<compile_context>
chip_gen: v5e
topology: v5e:2x2
jax: 0.10.0
libtpu: 0.0.40
codegen_flags: <defaults>
</compile_context>

<pallas_src>
import jax
import jax.numpy as jnp
from jax import lax
from jax.experimental import pallas as pl
from jax.experimental.pallas import tpu as pltpu


def _mlp_proj_kernel(x_ref, w_ref, b_ref, o_ref):
    # x_ref: (C, t_hw) -- NCHW data read as-is; contraction over C (LHS axis 0)
    #                     so no host-side transpose of the activation tensor.
    # w_ref: (C, E), b_ref: (1, E) f32, o_ref: (t_hw, E) lane-dense.
    acc = lax.dot_general(
        x_ref[...], w_ref[...],
        dimension_numbers=(((0,), (0,)), ((), ())),   # x^T @ W on the MXU
        preferred_element_type=jnp.float32,
    )
    o_ref[...] = (acc + b_ref[...]).astype(o_ref.dtype)


def _vmem_capacity_bytes():
    """Per-TensorCore VMEM capacity (v5e/v6e 128 MiB, v7x 64 MiB)."""
    try:
        return int(pltpu.get_tpu_info().vmem_capacity_bytes)
    except Exception:
        return 64 * 1024 * 1024   # conservative fallback (v7x per-TC VMEM)


def _tile_vmem_need(t, c, e, x_bytes, out_bytes, w_bytes):
    """Bytes of VMEM one grid step needs for spatial tile size t."""
    return (2 * c * t * x_bytes        # double-buffered x tile
            + 2 * t * e * out_bytes    # double-buffered output tile
            + t * e * 4                # f32 MXU accumulator
            + 2 * c * e * w_bytes      # resident weight (conservatively 2 bufs)
            + 2 * e * 4)               # resident bias


def _pick_t_hw(hw, c, e, x_bytes, out_bytes, w_bytes, budget):
    """Largest lane-dense spatial tile that divides HW and fits the budget."""
    need = lambda t: _tile_vmem_need(t, c, e, x_bytes, out_bytes, w_bytes)
    # One full tile (always a legal block shape) when small enough.
    if hw <= 4096 and need(hw) <= budget:
        return hw
    # Largest-first lane-dense candidates (multiples of 128) that divide HW.
    for t in (4096, 2048, 1024, 512, 256, 128):
        if hw % t == 0 and need(t) <= budget:
            return t
    # Fallback: largest multiple-of-128 divisor of HW that fits the budget.
    for t in range(hw - (hw % 128), 0, -128):
        if t > 0 and hw % t == 0 and need(t) <= budget:
            return t
    # Last resort (tiny / awkward HW): a single full tile.
    return hw


def mlp_forward(x, weight, bias, *, compute_dtype=jnp.bfloat16, out_dtype=None):
    """PyTorch MLP.forward: Linear over channels of flattened spatial dims.

    x: (B, C, H, W). weight: (C, E) (= torch Linear weight transposed).
    bias: (E,). Returns (B, H*W, E) in `out_dtype` (default: x.dtype).
    `compute_dtype` (default bf16) casts x/weight for the matmul only;
    accumulation and the bias add stay f32.
    """
    B, C, H, W = x.shape
    E = weight.shape[1]
    HW = H * W
    out_dtype = x.dtype if out_dtype is None else out_dtype

    # NCHW -> (B, C, HW): pure reshape, no data movement, no transpose.
    x3d = x.reshape(B, C, HW)
    b2d = bias.reshape(1, E).astype(jnp.float32)
    if compute_dtype is not None:
        x3d = x3d.astype(compute_dtype)
        weight = weight.astype(compute_dtype)

    x_bytes = jnp.dtype(x3d.dtype).itemsize
    w_bytes = jnp.dtype(weight.dtype).itemsize
    out_bytes = jnp.dtype(out_dtype).itemsize

    # Generation-aware VMEM budgeting: use half of physical per-TC VMEM for
    # the tile search, leaving headroom for Mosaic internal scratch.
    capacity = _vmem_capacity_bytes()
    budget = capacity // 2

    t_hw = _pick_t_hw(HW, C, E, x_bytes, out_bytes, w_bytes, budget)
    assert HW % t_hw == 0
    n_hw = HW // t_hw

    # v7x has 2 TensorCores sharded over "parallel" axes; guarantee >= 2 grid
    # steps for single-batch inputs when a legal (multiple-of-128) split exists.
    if B * n_hw < 2 and HW % 256 == 0:
        t_hw = HW // 2
        n_hw = 2

    need = _tile_vmem_need(t_hw, C, E, x_bytes, out_bytes, w_bytes)
    vmem_limit = int(min(capacity, max(2 * need + (2 << 20), 16 << 20)))

    cost = pl.CostEstimate(
        flops=2 * B * HW * C * E,
        transcendentals=0,
        bytes_accessed=(x_bytes * B * C * HW        # activation read
                        + w_bytes * C * E           # weight read
                        + 4 * E                     # bias read
                        + out_bytes * B * HW * E),  # output write
    )

    if n_hw == 1:
        # Drop the degenerate spatial grid axis: one step per batch element.
        grid = (B,)
        in_specs = [
            pl.BlockSpec((None, C, HW), lambda b: (b, 0, 0)),
            pl.BlockSpec((C, E), lambda b: (0, 0)),
            pl.BlockSpec((1, E), lambda b: (0, 0)),
        ]
        out_specs = pl.BlockSpec((None, HW, E), lambda b: (b, 0, 0))
        dim_sem = ("parallel",)
    else:
        grid = (B, n_hw)
        in_specs = [
            # x tile (C, t_hw): spatial axis on the lane dim (dense).
            pl.BlockSpec((None, C, t_hw), lambda b, i: (b, 0, i)),
            # Weight & bias: constant index_map -> DMA'd once, VMEM-resident.
            pl.BlockSpec((C, E), lambda b, i: (0, 0)),
            pl.BlockSpec((1, E), lambda b, i: (0, 0)),
        ]
        out_specs = pl.BlockSpec((None, t_hw, E), lambda b, i: (b, i, 0))
        dim_sem = ("parallel", "parallel")

    out = pl.pallas_call(
        _mlp_proj_kernel,
        out_shape=jax.ShapeDtypeStruct((B, HW, E), out_dtype),
        grid_spec=pltpu.PrefetchScalarGridSpec(
            num_scalar_prefetch=0,
            grid=grid,
            in_specs=in_specs,
            out_specs=out_specs,
        ),
        compiler_params=pltpu.CompilerParams(
            dimension_semantics=dim_sem,
            vmem_limit_bytes=vmem_limit,
        ),
        cost_estimate=cost,
    )(x3d, weight, b2d)

    return out


if __name__ == "__main__":
    # Small shapes consistent with the module's forward:
    #   input_dim (= C) = 32, embed_dim = 128, B = 2, H = W = 8  => seq = 64
    B, C, H, W = 2, 32, 8, 8
    E = 128

    key = jax.random.PRNGKey(0)
    kx, kw, kb = jax.random.split(key, 3)

    x = jax.random.normal(kx, (B, C, H, W), dtype=jnp.float32)

    # nn.Linear(input_dim, embed_dim): weight (E, C), bias (E,),
    # init U(-1/sqrt(C), 1/sqrt(C)).
    bound = 1.0 / (C ** 0.5)
    w_torch_layout = jax.random.uniform(kw, (E, C), minval=-bound, maxval=bound,
                                        dtype=jnp.float32)
    bias = jax.random.uniform(kb, (E,), minval=-bound, maxval=bound,
                              dtype=jnp.float32)
    weight = w_torch_layout.T  # (C, E): out = x^T-contraction @ weight + bias

    # Plain-JAX f32 reference of the PyTorch forward.
    x_t = jnp.transpose(x.reshape(B, C, H * W), (0, 2, 1))
    ref = x_t @ weight + bias

    # 1) Exact f32 path.
    out_f32 = jax.block_until_ready(
        mlp_forward(x, weight, bias, compute_dtype=None))
    assert out_f32.shape == (B, H * W, E)
    assert jnp.allclose(out_f32, ref, atol=1e-4, rtol=1e-4), float(
        jnp.max(jnp.abs(out_f32 - ref)))

    # 2) Default bandwidth-optimized path (bf16 compute, f32 accumulation).
    out_def = jax.block_until_ready(mlp_forward(x, weight, bias))
    assert out_def.shape == (B, H * W, E)
    assert jnp.allclose(out_def, ref, atol=3e-2, rtol=3e-2), float(
        jnp.max(jnp.abs(out_def - ref)))

    print("KERNEL_OK")
</pallas_src>

<mosaic_0001>
module attributes {stable_mosaic.version = 11 : i64} {
  func.func @_mlp_proj_kernel(%arg0: i32, %arg1: memref<1x32x64xf32, #tpu.memory_space<vmem>>, %arg2: memref<32x128xf32, #tpu.memory_space<vmem>>, %arg3: memref<1x128xf32, #tpu.memory_space<vmem>>, %arg4: memref<1x64x128xf32, #tpu.memory_space<vmem>>) attributes {dimension_semantics = [#tpu.dimension_semantics<parallel>], iteration_bounds = array<i64: 2>, scalar_prefetch = 0 : i64, scratch_operands = 0 : i64, tpu.core_type = #tpu.core_type<tc>, window_params = [{transform_indices = @transform_0, window_bounds = array<i64: 1, 32, 64>}, {pipeline_mode = #tpu.pipeline_mode<synchronous>, transform_indices = @transform_1, window_bounds = array<i64: 32, 128>}, {pipeline_mode = #tpu.pipeline_mode<synchronous>, transform_indices = @transform_2, window_bounds = array<i64: 1, 128>}, {transform_indices = @transform_3, window_bounds = array<i64: 1, 64, 128>}]} {
    %c0 = arith.constant 0 : index
    %c0_0 = arith.constant 0 : index
    %c0_1 = arith.constant 0 : index
    %0 = vector.load %arg1[%c0, %c0_0, %c0_1] : memref<1x32x64xf32, #tpu.memory_space<vmem>>, vector<1x32x64xf32>
    %1 = vector.shape_cast %0 : vector<1x32x64xf32> to vector<32x64xf32>
    %c0_2 = arith.constant 0 : index
    %c0_3 = arith.constant 0 : index
    %2 = vector.load %arg2[%c0_2, %c0_3] : memref<32x128xf32, #tpu.memory_space<vmem>>, vector<32x128xf32>
    %cst = arith.constant dense<0.000000e+00> : vector<64x128xf32>
    %3 = tpu.matmul %1, %2, %cst {dimension_numbers = #tpu.dot_dimension_numbers<[0], [0], [1], [1], [0, 1, 1, 1], [], []>} : vector<32x64xf32>, vector<32x128xf32>, vector<64x128xf32> -> vector<64x128xf32>
    %c0_4 = arith.constant 0 : index
    %c0_5 = arith.constant 0 : index
    %4 = vector.load %arg3[%c0_4, %c0_5] : memref<1x128xf32, #tpu.memory_space<vmem>>, vector<1x128xf32>
    %5 = vector.broadcast %4 : vector<1x128xf32> to vector<64x128xf32>
    %6 = arith.addf %3, %5 : vector<64x128xf32>
    %c0_6 = arith.constant 0 : index
    %c0_7 = arith.constant 0 : index
    %c0_8 = arith.constant 0 : index
    %7 = vector.load %arg4[%c0_6, %c0_7, %c0_8] : memref<1x64x128xf32, #tpu.memory_space<vmem>>, vector<1x64x128xf32>
    %8 = vector.shape_cast %7 : vector<1x64x128xf32> to vector<64x128xf32>
    %9 = vector.shape_cast %6 : vector<64x128xf32> to vector<1x64x128xf32>
    tpu.vector_store %arg4[%c0_6, %c0_7, %c0_8], %9 {strides = array<i32>} : memref<1x64x128xf32, #tpu.memory_space<vmem>>, vector<1x64x128xf32>,
    return
  }
  func.func @transform_0(%arg0: i32) -> (i32, i32, i32) {
    %c0_i32 = arith.constant 0 : i32
    %c0_i32_0 = arith.constant 0 : i32
    %c0_i32_1 = arith.constant 0 : i32
    return %arg0, %c0_i32, %c0_i32_0 : i32, i32, i32
  }
  func.func @transform_1(%arg0: i32) -> (i32, i32) {
    %c0_i32 = arith.constant 0 : i32
    %c0_i32_0 = arith.constant 0 : i32
    %c0_i32_1 = arith.constant 0 : i32
    return %c0_i32, %c0_i32_0 : i32, i32
  }
  func.func @transform_2(%arg0: i32) -> (i32, i32) {
    %c0_i32 = arith.constant 0 : i32
    %c0_i32_0 = arith.constant 0 : i32
    %c0_i32_1 = arith.constant 0 : i32
    return %c0_i32, %c0_i32_0 : i32, i32
  }
  func.func @transform_3(%arg0: i32) -> (i32, i32, i32) {
    %c0_i32 = arith.constant 0 : i32
    %c0_i32_0 = arith.constant 0 : i32
    %c0_i32_1 = arith.constant 0 : i32
    return %arg0, %c0_i32, %c0_i32_0 : i32, i32, i32
  }
}

</mosaic_0001>

<llo_original>
// kernel: tpu_custom_call.1
$region0: #{tpu_custom_call.1}
  #allocation0 [shape = 'u32[]', space=smem, size = 0x4, offset = 0x4, fixed_abs, tag = 'smem constant byte address 0x4 - core index']
  #allocation1 [shape = 'u32[72,128]{1,0:T(1,128)}', space=vmem, size = 0x9000, scoped, tag = 'internal scratch']
  %s0 = inlined_call_operand.hbm [shape: f32[2,32,64], index: 0, kind: input, shape index: {}]
  %s1 = inlined_call_operand.hbm [shape: f32[32,128], index: 1, kind: input, shape index: {}]
  %s2 = inlined_call_operand.vmem [shape: f32[1,128], index: 2, kind: input, shape index: {}]
  %s3 = inlined_call_operand.hbm [shape: f32[2,64,128], index: 3, kind: output, shape index: {}]
  %s4 = sld [smem:[#allocation0]]
  $region53: #{tpu_custom_call.1} parent=0
    _
  %s6 = ssub.s32 1, %s4
  %s7 = scalar_select 0, %s6, %s4
  $region1: #{tpu_custom_call.1} parent=0
    #allocation2 [shape = 'u8[32768]{0}', space=vmem, size = 0x8000, scoped, tag = 'input window, operand 0']
    #allocation3 [shape = 's32[2]{0}', space=sflag, size = 0x8, scoped, tag = 'scoped memory for tpu_custom_call.1']
    #allocation4 [shape = 's32[2]{0}', space=sflag, size = 0x8, scoped, tag = 'scoped memory for tpu_custom_call.1']
    #allocation5 [shape = 'u8[16384]{0}', space=vmem, size = 0x4000, scoped, tag = 'input window, operand 1, single buffered']
    #allocation6 [shape = 's32[1]{0}', space=sflag, size = 0x4, scoped, tag = 'scoped memory for tpu_custom_call.1']
    #allocation7 [shape = 'u8[65536]{0}', space=vmem, size = 0x10000, scoped, tag = 'output window, operand 0']
    %8 = vsyncpa [#allocation3], 0
    %s9 = scalar_lea.sflag [#allocation3], 1
    %10 = vsyncpa %s9, 0
    %11 = vsyncpa [#allocation6], 0
    %12 = vsyncpa [#allocation4], 0
    %s13 = scalar_lea.sflag [#allocation4], 1
    %14 = vsyncpa %s13, 0
    loop: start=0, step=1, limit=4
    $region2: #{tpu_custom_call.1} parent=1 // loop_pre_header
      _
    $region3: #{tpu_custom_call.1} parent=1 // loop_header
      %s16 = sphi 0, %s20
      %p17 = scmp.ge.s32.totalorder %s16, 4
      %s26 = sphi 0, %s28
      %s29 = sphi 0, %s26
      %s30 = sphi 0, %s29
      %s46 = sphi 0, %s30
      %s50 = sphi 0, %s50
      %s52 = sphi 0, %s50
      %s53 = sphi 0, %s52
      %s67 = sphi 0, %s53
      %s71 = sphi 0, %s71
      %s73 = sphi 0, %s71
      %s74 = sphi 0, %s73
      %s88 = sphi 0, %s74
      %s94 = sphi 0, %s96
      %s97 = sphi 0, %s94
      %s98 = sphi 0, %s97
      %s114 = sphi 0, %s98
    $region4: #{tpu_custom_call.1} parent=1 // loop_header_branch
      %19 = sbr.rel (%p17) target = $region8
    $region5: #{tpu_custom_call.1} parent=1 // loop_body
      %s21 = ssub.s32 %s16, 1
      %s22 = ssub.s32 %s16, 2
      %s23 = sadd.s32 %s16, 1
      %s24 = ssub.s32 %s16, %s23
      %p25 = scmp.eq.s32.totalorder %s24, 0
      %s27 = sadd.s32 %s26, 1
      %s28 = scalar_select %p25, %s26, %s27
      %p31 = pneg %p25
      %p32 = scmp.eq.s32.totalorder %s16, 1
      %p33 = por %p31, %p32
      %p34 = scmp.ne.s32.totalorder %s26, %s29
      %p35 = scmp.eq.s32.totalorder %s16, 0
      %p36 = por %p34, %p35
      %p37 = scmp.ne.s32.totalorder %s26, %s29
      %p38 = scmp.eq.s32.totalorder %s21, 1
      %p39 = por %p37, %p38
      %p40 = scmp.ne.s32.totalorder %s29, %s30
      %p41 = scmp.eq.s32.totalorder %s21, 0
      %p42 = por %p40, %p41
      %p43 = scmp.ne.s32.totalorder %s29, %s30
      %p44 = scmp.eq.s32.totalorder %s22, 1
      %p45 = por %p43, %p44
      %p47 = scmp.ne.s32.totalorder %s30, %s46
      %p48 = scmp.eq.s32.totalorder %s22, 0
      %p49 = por %p47, %p48
      %s51 = sadd.s32 %s50, 1
      %p54 = scmp.eq.s32.totalorder %s16, 1
      %p55 = scmp.ne.s32.totalorder %s50, %s52
      %p56 = scmp.eq.s32.totalorder %s16, 0
      %p57 = por %p55, %p56
      %p58 = scmp.ne.s32.totalorder %s50, %s52
      %p59 = scmp.eq.s32.totalorder %s21, 1
      %p60 = por %p58, %p59
      %p61 = scmp.ne.s32.totalorder %s52, %s53
      %p62 = scmp.eq.s32.totalorder %s21, 0
      %p63 = por %p61, %p62
      %p64 = scmp.ne.s32.totalorder %s52, %s53
      %p65 = scmp.eq.s32.totalorder %s22, 1
      %p66 = por %p64, %p65
      %p68 = scmp.ne.s32.totalorder %s53, %s67
      %p69 = scmp.eq.s32.totalorder %s22, 0
      %p70 = por %p68, %p69
      %s72 = sadd.s32 %s71, 1
      %p75 = scmp.eq.s32.totalorder %s16, 1
      %p76 = scmp.ne.s32.totalorder %s71, %s73
      %p77 = scmp.eq.s32.totalorder %s16, 0
      %p78 = por %p76, %p77
      %p79 = scmp.ne.s32.totalorder %s71, %s73
      %p80 = scmp.eq.s32.totalorder %s21, 1
      %p81 = por %p79, %p80
      %p82 = scmp.ne.s32.totalorder %s73, %s74
      %p83 = scmp.eq.s32.totalorder %s21, 0
      %p84 = por %p82, %p83
      %p85 = scmp.ne.s32.totalorder %s73, %s74
      %p86 = scmp.eq.s32.totalorder %s22, 1
      %p87 = por %p85, %p86
      %p89 = scmp.ne.s32.totalorder %s74, %s88
      %p90 = scmp.eq.s32.totalorder %s22, 0
      %p91 = por %p89, %p90
      %s92 = ssub.s32 %s16, %s23
      %p93 = scmp.eq.s32.totalorder %s92, 0
      %s95 = sadd.s32 %s94, 1
      %s96 = scalar_select %p93, %s94, %s95
      %p99 = pneg %p93
      %p100 = scmp.eq.s32.totalorder %s16, 1
      %p101 = por %p99, %p100
      %p102 = scmp.ne.s32.totalorder %s94, %s97
      %p103 = scmp.eq.s32.totalorder %s16, 0
      %p104 = por %p102, %p103
      %p105 = scmp.ne.s32.totalorder %s94, %s97
      %p106 = scmp.eq.s32.totalorder %s21, 1
      %p107 = por %p105, %p106
      %p108 = scmp.ne.s32.totalorder %s97, %s98
      %p109 = scmp.eq.s32.totalorder %s21, 0
      %p110 = por %p108, %p109
      %p111 = scmp.ne.s32.totalorder %s97, %s98
      %p112 = scmp.eq.s32.totalorder %s22, 1
      %p113 = por %p111, %p112
      %p115 = scmp.ne.s32.totalorder %s98, %s114
      %p116 = scmp.eq.s32.totalorder %s22, 0
      %p117 = por %p115, %p116
      %p118 = scmp.le.s32.totalorder 1, %s16
      %p119 = scmp.lt.s32.totalorder %s16, 3
      %p120 = pnand %p118, %p119
      %p121 = pneg %p120
      // Predicated region
      $region9: #{tpu_custom_call.1} parent=5 // pred_check
        _
      $region10: #{tpu_custom_call.1} parent=5 // pred_check_branch
        %123 = sbr.rel (%p120) target = $region12
      $region11: #{tpu_custom_call.1} parent=5 // pred_region
        %s124 = ssub.s32 %s16, 1
        // Predicated region
        $region13: #{tpu_custom_call.1} parent=11 // pred_check
          %p125 = pneg %p63
        $region14: #{tpu_custom_call.1} parent=11 // pred_check_branch
          %127 = sbr.rel (%p125) target = $region16
        $region15: #{tpu_custom_call.1} parent=11 // pred_region
          %129 = vsyncadd [#allocation6], 0
          %s130 = sshll.u32 %s1, 4
          %s131 = int_to_ptr.hbm [resolvable:$true] %s130
          %s132 = sshll.u32 [#allocation5], 4
          %s133 = int_to_ptr.vmem [resolvable:$true] %s132
          %138 = dma.hbm_to_vmem [thread:$0]  %s131, 512, %s133, [#allocation6], 128, 128, 8
        $region16: #{tpu_custom_call.1} parent=11 // pred_fallthru
          _
        // Predicated region
        $region17: #{tpu_custom_call.1} parent=11 // pred_check
          %p139 = pneg %p84
        $region18: #{tpu_custom_call.1} parent=11 // pred_check_branch
          %141 = sbr.rel (%p139) target = $region20
        $region19: #{tpu_custom_call.1} parent=11 // pred_region
          _
        $region20: #{tpu_custom_call.1} parent=11 // pred_fallthru
          _
      $region12: #{tpu_custom_call.1} parent=5 // pred_fallthru
        _
      %p142 = scmp.lt.s32.totalorder %s16, 2
      // Predicated region
      $region21: #{tpu_custom_call.1} parent=5 // pred_check
        %p143 = pneg %p142
      $region22: #{tpu_custom_call.1} parent=5 // pred_check_branch
        %145 = sbr.rel (%p143) target = $region24
      $region23: #{tpu_custom_call.1} parent=5 // pred_region
        // Predicated region
        $region25: #{tpu_custom_call.1} parent=23 // pred_check
          %p146 = pneg %p36
        $region26: #{tpu_custom_call.1} parent=23 // pred_check_branch
          %148 = sbr.rel (%p146) target = $region28
        $region27: #{tpu_custom_call.1} parent=23 // pred_region
          %s149 = sand.u32 %s26, 1
          %s150 = scalar_lea.sflag [#allocation3], %s149
          %s151 = sand.u32 %s26, 1
          %s152 = smul.addr %s151, 32
          %s153 = scalar_lea.vmem [#allocation2], %s152
          %155 = vsyncadd %s150, 0
          %s156 = smul.addr %s16, 4
          %s157 = smul.addr %s156, 8
          %s158 = scalar_lea.hbm %s0, %s157
          %s159 = sshll.u32 %s158, 4
          %s160 = int_to_ptr.hbm [resolvable:$true] %s159
          %s161 = sshll.u32 %s153, 4
          %s162 = int_to_ptr.vmem [resolvable:$true] %s161
          %167 = dma.hbm_to_vmem [thread:$0]  %s160, 512, %s162, %s150, 128, 128, 8
        $region28: #{tpu_custom_call.1} parent=23 // pred_fallthru
          _
      $region24: #{tpu_custom_call.1} parent=5 // pred_fallthru
        _
      %p168 = scmp.le.s32.totalorder 1, %s16
      %p169 = scmp.lt.s32.totalorder %s16, 3
      %p170 = pnand %p168, %p169
      %p171 = pneg %p170
      // Predicated region
      $region29: #{tpu_custom_call.1} parent=5 // pred_check
        _
      $region30: #{tpu_custom_call.1} parent=5 // pred_check_branch
        %173 = sbr.rel (%p170) target = $region32
      $region31: #{tpu_custom_call.1} parent=5 // pred_region
        %s174 = ssub.s32 %s16, 1
        %s175 = sand.u32 %s29, 1
        %s176 = scalar_lea.sflag [#allocation3], %s175
        %s177 = sand.u32 %s29, 1
        %s178 = smul.addr %s177, 32
        %s179 = scalar_lea.vmem [#allocation2], %s178
        // Predicated region
        $region33: #{tpu_custom_call.1} parent=31 // pred_check
          %p180 = pneg %p42
        $region34: #{tpu_custom_call.1} parent=31 // pred_check_branch
          %182 = sbr.rel (%p180) target = $region36
        $region35: #{tpu_custom_call.1} parent=31 // pred_region
          %184 = dma.done %s176, 512
        $region36: #{tpu_custom_call.1} parent=31 // pred_fallthru
          _
        // Predicated region
        $region37: #{tpu_custom_call.1} parent=31 // pred_check
          %p185 = pneg %p63
        $region38: #{tpu_custom_call.1} parent=31 // pred_check_branch
          %187 = sbr.rel (%p185) target = $region40
        $region39: #{tpu_custom_call.1} parent=31 // pred_region
          %189 = dma.done [#allocation6], 512
        $region40: #{tpu_custom_call.1} parent=31 // pred_fallthru
          _
        %s190 = sand.u32 %s29, 1
        %s191 = scalar_lea.sflag [#allocation3], %s190
        %s192 = sand.u32 %s29, 1
        %s193 = smul.addr %s192, 32
        %s194 = scalar_lea.vmem [#allocation2], %s193
        %p195 = pneg %p42
        %p196 = pneg %p39
        %p197 = pneg %p63
        %p198 = pneg %p60
        %p199 = pneg %p84
        %p200 = pneg %p81
        %p201 = pneg %p110
        %p202 = pneg %p107
        %s203 = sand.u32 %s97, 1
        %s204 = scalar_lea.sflag [#allocation4], %s203
        %s205 = sand.u32 %s97, 1
        %s206 = smul.addr %s205, 64
        %s207 = scalar_lea.vmem [#allocation7], %s206
        %v208 = vld [vmem:[%s179] sm:$0xff]
        %v209 = vld [vmem:[%s179 + $0x8] sm:$0xff]
        %v210 = vld [vmem:[%s179 + $0x10] sm:$0xff]
        %v211 = vld [vmem:[%s179 + $0x18] sm:$0xff]
        %v212 = vld [vmem:[#allocation5] sm:$0xff]
        %v213 = vld [vmem:[#allocation5 + $0x8] sm:$0xff]
        %v214 = vld [vmem:[#allocation5 + $0x10] sm:$0xff]
        %v215 = vld [vmem:[#allocation5 + $0x18] sm:$0xff]
        %v216 = vld [vmem:[%s2] sm:$0x1]
        %v218 = vperm.slane %v216, 0
        %220 = vxpose.xlu0.b32.start [1/16] %v208, 128
        %221 = vxpose.xlu0.b32.cont [2/16] %v209, 128
        %222 = vxpose.xlu0.b32.cont [3/16] %v210, 128
        %223 = vxpose.xlu0.b32.cont [4/16] %v211, 128
        %224 = vxpose.xlu0.b32.cont [5/16] 0.0, 128
        %225 = vxpose.xlu0.b32.cont [6/16] 0.0, 128
        %226 = vxpose.xlu0.b32.cont [7/16] 0.0, 128
        %227 = vxpose.xlu0.b32.cont [8/16] 0.0, 128
        %228 = vxpose.xlu0.b32.cont [9/16] 0.0, 128
        %229 = vxpose.xlu0.b32.cont [10/16] 0.0, 128
        %230 = vxpose.xlu0.b32.cont [11/16] 0.0, 128
        %231 = vxpose.xlu0.b32.cont [12/16] 0.0, 128
        %232 = vxpose.xlu0.b32.cont [13/16] 0.0, 128
        %233 = vxpose.xlu0.b32.cont [14/16] 0.0, 128
        %234 = vxpose.xlu0.b32.cont [15/16] 0.0, 128
        %235 = vxpose.xlu0.b32.end [16/16] 0.0, 128
        %v236 = vpop.trf.xlu0
        %v237 = vpop.trf.xlu0
        %v238 = vpop.trf.xlu0
        %v239 = vpop.trf.xlu0
        %v240 = vpop.trf.xlu0
        %v241 = vpop.trf.xlu0
        %v242 = vpop.trf.xlu0
        %v243 = vpop.trf.xlu0
        %v244 = vpop.trf.xlu0
        %v245 = vpop.trf.xlu0
        %v246 = vpop.trf.xlu0
        %v247 = vpop.trf.xlu0
        %v248 = vpop.trf.xlu0
        %v249 = vpop.trf.xlu0
        %v250 = vpop.trf.xlu0
        %v251 = vpop.trf.xlu0
        %vm252 = vcmask 261120
        %v254 = vsel %vm252, %v236, 0
        %v257 = vsel %vm252, %v237, 0
        %v260 = vsel %vm252, %v238, 0
        %v263 = vsel %vm252, %v239, 0
        %v266 = vsel %vm252, %v240, 0
        %v269 = vsel %vm252, %v241, 0
        %v272 = vsel %vm252, %v242, 0
        %v275 = vsel %vm252, %v243, 0
        %277 = vmatpush.msra.mxu0 0.0
        %278 = vmatpush.msra.mxu0 0.0
        %279 = vmatpush.msra.mxu0 0.0
        %280 = vmatpush.msra.mxu0 0.0
        %281 = vmatpush.msra.mxu0 0.0
        %282 = vmatpush.msra.mxu0 0.0
        %283 = vmatpush.msra.mxu0 0.0
        %284 = vmatpush.msra.mxu0 0.0
        %285 = vmatpush.msra.mxu0 0.0
        %286 = vmatpush.msra.mxu0 0.0
        %287 = vmatpush.msra.mxu0 0.0
        %288 = vmatpush.msra.mxu0 0.0
        %289 = vmatpush.msra.mxu0 %v215
        %290 = vmatpush.msra.mxu0 %v214
        %291 = vmatpush.msra.mxu0 %v213
        %292 = vmatpush.msra.mxu0 %v212
        %293 = vmatmul.f32.gmra.mxu0 %v254
        %v294 = vpop.f32.mrf.mxu0
        %v295 = vadd.f32 %v218, %v294
        %296 = vmatmul.f32.gmra.mxu0 %v257
        %v297 = vpop.f32.mrf.mxu0
        %v298 = vadd.f32 %v218, %v297
        %299 = vmatmul.f32.gmra.mxu0 %v260
        %v300 = vpop.f32.mrf.mxu0
        %v301 = vadd.f32 %v218, %v300
        %302 = vmatmul.f32.gmra.mxu0 %v263
        %v303 = vpop.f32.mrf.mxu0
        %v304 = vadd.f32 %v218, %v303
        %305 = vmatmul.f32.gmra.mxu0 %v266
        %v306 = vpop.f32.mrf.mxu0
        %v307 = vadd.f32 %v218, %v306
        %308 = vmatmul.f32.gmra.mxu0 %v269
        %v309 = vpop.f32.mrf.mxu0
        %v310 = vadd.f32 %v218, %v309
        %311 = vmatmul.f32.gmra.mxu0 %v272
        %v312 = vpop.f32.mrf.mxu0
        %v313 = vadd.f32 %v218, %v312
        %314 = vmatmul.f32.gmra.mxu0 %v275
        %v315 = vpop.f32.mrf.mxu0
        %v316 = vadd.f32 %v218, %v315
        %317 = vdwg.mxu0
        %318 = vst [vmem:[%s207] sm:$0xff] %v295
        %319 = vst [vmem:[%s207 + $0x8] sm:$0xff] %v298
        %320 = vst [vmem:[%s207 + $0x10] sm:$0xff] %v301
        %321 = vst [vmem:[%s207 + $0x18] sm:$0xff] %v304
        %322 = vst [vmem:[%s207 + $0x20] sm:$0xff] %v307
        %323 = vst [vmem:[%s207 + $0x28] sm:$0xff] %v310
        %324 = vst [vmem:[%s207 + $0x30] sm:$0xff] %v313
        %325 = vst [vmem:[%s207 + $0x38] sm:$0xff] %v316
        %s326 = sand.u32 %s97, 1
        %s327 = scalar_lea.sflag [#allocation4], %s326
        %s328 = sand.u32 %s97, 1
        %s329 = smul.addr %s328, 64
        %s330 = scalar_lea.vmem [#allocation7], %s329
        // Predicated region
        $region41: #{tpu_custom_call.1} parent=31 // pred_check
          %p331 = pneg %p107
        $region42: #{tpu_custom_call.1} parent=31 // pred_check_branch
          %333 = sbr.rel (%p331) target = $region44
        $region43: #{tpu_custom_call.1} parent=31 // pred_region
          %335 = vsyncadd %s327, 0
          %s336 = smul.addr %s21, 8
          %s337 = smul.addr %s336, 8
          %s338 = scalar_lea.hbm %s3, %s337
          %s339 = sshll.u32 %s330, 4
          %s340 = int_to_ptr.vmem [resolvable:$true] %s339
          %s341 = sshll.u32 %s338, 4
          %s342 = int_to_ptr.hbm [resolvable:$true] %s341
          %347 = dma.vmem_to_hbm [thread:$0]  %s340, 1024, %s342, %s327, 128, 128, 8
        $region44: #{tpu_custom_call.1} parent=31 // pred_fallthru
          _
      $region32: #{tpu_custom_call.1} parent=5 // pred_fallthru
        _
      %p348 = scmp.le.s32.totalorder 2, %s16
      // Predicated region
      $region45: #{tpu_custom_call.1} parent=5 // pred_check
        %p349 = pneg %p348
      $region46: #{tpu_custom_call.1} parent=5 // pred_check_branch
        %351 = sbr.rel (%p349) target = $region48
      $region47: #{tpu_custom_call.1} parent=5 // pred_region
        %s352 = ssub.s32 %s16, 2
        // Predicated region
        $region49: #{tpu_custom_call.1} parent=47 // pred_check
          %p353 = pneg %p113
        $region50: #{tpu_custom_call.1} parent=47 // pred_check_branch
          %355 = sbr.rel (%p353) target = $region52
        $region51: #{tpu_custom_call.1} parent=47 // pred_region
          %s356 = sand.u32 %s98, 1
          %s357 = scalar_lea.sflag [#allocation4], %s356
          %s358 = sand.u32 %s98, 1
          %s359 = smul.addr %s358, 64
          %s360 = scalar_lea.vmem [#allocation7], %s359
          %362 = dma.done %s357, 1024
        $region52: #{tpu_custom_call.1} parent=47 // pred_fallthru
          _
      $region48: #{tpu_custom_call.1} parent=5 // pred_fallthru
        _
    $region6: #{tpu_custom_call.1} parent=1 // loop_footer
      %s20 = sadd.s32 1, %s16
    $region7: #{tpu_custom_call.1} parent=1 // loop_footer_branch
      %15 = sbr.rel target = $region3
    $region8: #{tpu_custom_call.1} parent=1 // loop_exit
      _
    %363 = vsyncpa [#allocation3], 1
    %s364 = scalar_lea.sflag [#allocation3], 1
    %365 = vsyncpa %s364, 1
    %366 = vsyncpa [#allocation6], 1
    %367 = vsyncpa [#allocation4], 1
    %s368 = scalar_lea.sflag [#allocation4], 1
    %369 = vsyncpa %s368, 1

</llo_original>
